<compile_context>
chip_gen: v7x
topology: tpu7x:2x2x1
jax: 0.10.0
libtpu: 0.0.40
codegen_flags: <defaults>
</compile_context>

<pallas_src>
import jax
import jax.numpy as jnp
from jax.experimental import pallas as pl
from jax.experimental.pallas import tpu as pltpu


# ---------------------------------------------------------------------------
# Synthetic MPE-style decomposer / config (shapes only; deterministic init)
# ---------------------------------------------------------------------------
class Config:
    n_agents = 3
    n_landmarks = 2            # n_enemy
    n_actions = 5
    own_obs_dim = 6
    obs_nf_en = 4
    obs_nf_al = 4
    state_nf_al = 5
    state_nf_en = 3
    task_repre_dim = 8
    entity_embed_dim = 32
    state_latent_dim = 16

    @property
    def n_ally(self):
        return self.n_agents - 1

    @property
    def obs_dim(self):
        return (self.own_obs_dim + self.n_landmarks * self.obs_nf_en
                + self.n_ally * self.obs_nf_al)

    @property
    def state_dim(self):
        return self.n_agents * self.state_nf_al + self.n_landmarks * self.state_nf_en


def decompose_obs(cfg, obs2d):
    """obs2d: (bs*n_agents, obs_dim) -> own, [enemy feats], [ally feats]."""
    off = cfg.own_obs_dim
    own = obs2d[:, :off]
    enemy = []
    for _ in range(cfg.n_landmarks):
        enemy.append(obs2d[:, off:off + cfg.obs_nf_en])
        off += cfg.obs_nf_en
    ally = []
    for _ in range(cfg.n_ally):
        ally.append(obs2d[:, off:off + cfg.obs_nf_al])
        off += cfg.obs_nf_al
    return own, enemy, ally


def decompose_state(cfg, state):
    """state: (bs, 1, state_dim) -> [ally states], [enemy states]."""
    off = 0
    ally = []
    for _ in range(cfg.n_agents):
        ally.append(state[..., off:off + cfg.state_nf_al])
        off += cfg.state_nf_al
    enemy = []
    for _ in range(cfg.n_landmarks):
        enemy.append(state[..., off:off + cfg.state_nf_en])
        off += cfg.state_nf_en
    return ally, enemy


def init_params(cfg, key):
    """Deterministic nn.Linear-style init; W stored as (in, out), b as (1, out)."""
    def linear(k, fan_in, fan_out):
        k1, k2 = jax.random.split(k)
        bound = 1.0 / float(fan_in) ** 0.5
        w = jax.random.uniform(k1, (fan_in, fan_out), jnp.float32, -bound, bound)
        b = jax.random.uniform(k2, (1, fan_out), jnp.float32, -bound, bound)
        return w, b

    keys = jax.random.split(key, 6)
    E, S, T = cfg.entity_embed_dim, cfg.state_latent_dim, cfg.task_repre_dim
    return {
        "own": linear(keys[0], cfg.own_obs_dim + cfg.n_actions, E),
        "ally": linear(keys[1], cfg.obs_nf_al, E),
        "enemy": linear(keys[2], cfg.obs_nf_en, E),
        "s_ally": linear(keys[3], cfg.state_nf_al, E),
        "s_enemy": linear(keys[4], cfg.state_nf_en, E),
        "hyper": linear(keys[5], T, E * 2 * S),
    }


# ---------------------------------------------------------------------------
# Parameter-only prep (cacheable / constant-folded under jit)
# ---------------------------------------------------------------------------
def prepare_params(cfg, params):
    """Stack per-entity embedding weights into concat-K matrices (obs+actions
    fused), fold the 1/n mean scales, and keep the (already folded) biases for
    the output-bias fold done in the wrapper."""
    wo, bo = params["own"]
    wa, ba = params["ally"]
    we, be = params["enemy"]
    wsa, bsa = params["s_ally"]
    wse, bse = params["s_enemy"]

    na, nal, nen = cfg.n_agents, cfg.n_ally, cfg.n_landmarks
    inv_obs = 1.0 / float(1 + nal + nen)
    inv_state = 1.0 / float(na + nen)

    # kernel input feature layout: [own | enemy_0..enemy_{nen-1} | ally_0..ally_{nal-1} | actions]
    w_obsact = jnp.concatenate(
        [wo[:cfg.own_obs_dim]] + [we] * nen + [wa] * nal + [wo[cfg.own_obs_dim:]],
        axis=0) * inv_obs                                            # (obs_dim + n_actions, E)
    b_obs = (bo + float(nal) * ba + float(nen) * be) * inv_obs       # (1, E)

    # state layout = [ally_0..ally_{na-1} | enemy_0..enemy_{nen-1}]
    w_state = jnp.concatenate([wsa] * na + [wse] * nen, axis=0) * inv_state   # (state_dim, E)
    b_state = (float(na) * bsa + float(nen) * bse) * inv_state                # (1, E)

    return w_obsact, b_obs, w_state, b_state


# ---------------------------------------------------------------------------
# Pallas kernel: lane-dense 2-D MXU dots only, one full-lane store per block
# ---------------------------------------------------------------------------
def _encoder_kernel(obsact_ref, st_ref, w_oa_ref, w_st_ref,
                    w_hs_ref, w_ho_ref, bias_ref, out_ref):
    f32 = jnp.float32
    n_agents = w_ho_ref.shape[0]

    # state branch (agent-invariant): (bs, E), mean scale folded into w_state
    sh = jnp.dot(st_ref[...], w_st_ref[...], preferred_element_type=f32)

    # state half of the hypernet transform for ALL agents at once + folded bias
    acc = jnp.dot(sh, w_hs_ref[...], preferred_element_type=f32) + bias_ref[...]   # (bs, n_pad)

    oa = obsact_ref[...]                                      # (bs, na, obs_dim + n_actions)
    # TODO(synk): bf16 dot operands (f32 accumulate) on v6e/v7x once 1e-3 budget is re-verified.
    for a in range(n_agents):                                 # static unroll, n_agents is tiny
        oh = jnp.dot(oa[:, a, :], w_oa_ref[...], preferred_element_type=f32)       # (bs, E)
        # block-diagonal obs-half weight: only agent a's 16 lanes are non-zero,
        # so the accumulator stays lane-contiguous with zero sub-slicing.
        acc = acc + jnp.dot(oh, w_ho_ref[a], preferred_element_type=f32)           # (bs, n_pad)

    out_ref[...] = acc.astype(out_ref.dtype)                  # unmasked full-lane store


# ---------------------------------------------------------------------------
# Wrapper
# ---------------------------------------------------------------------------
def _round_up(x, m):
    return ((x + m - 1) // m) * m


def pooling_mpe_encoder(cfg, params, obs, state, actions, task_repre):
    """Mirrors PoolingMPEEncoder.forward. Returns (encoded_latent, bs)."""
    na, E, S = cfg.n_agents, cfg.entity_embed_dim, cfg.state_latent_dim
    wh, bh = params["hyper"]

    if obs.ndim == 2:
        bs = obs.shape[0] // na
        obs = obs.reshape(bs, na, obs.shape[-1])
    else:
        bs = obs.shape[0]
    if actions.ndim == 2:
        actions = actions.reshape(bs, na, actions.shape[-1])

    w_obsact, b_obs, w_state, b_state = prepare_params(cfg, params)

    # Fuse obs + actions into one stream (one fewer DMA and matmul per grid step).
    obsact = jnp.concatenate([obs, actions], axis=-1)          # (bs, na, obs_dim + n_actions)

    # ---- hypernet evaluated outside the kernel (tiny XLA op on (na, T)) ----
    tw = (task_repre @ wh + bh).reshape(na, 2, E, S)
    tws, two = tw[:, 0], tw[:, 1]                              # (na, E, S) each

    n_lat = na * S
    n_pad = _round_up(max(n_lat, 128), 128)                    # lane-dense output width
    # state half for all agents as one (E, n_pad) weight; columns = (agent, s), s fast
    w_hs = jnp.pad(jnp.transpose(tws, (1, 0, 2)).reshape(E, n_lat),
                   ((0, 0), (0, n_pad - n_lat)))
    # obs half as block-diagonal (na, E, n_pad) weights (zero outside agent a's lanes)
    w_ho = jnp.zeros((na, E, n_pad), tws.dtype)
    for a in range(na):
        w_ho = w_ho.at[a, :, a * S:(a + 1) * S].set(two[a])
    # all biases (obs + state branches) folded straight into a single output bias
    bias_as = (jnp.einsum("e,aes->as", b_state[0], tws)
               + jnp.einsum("e,aes->as", b_obs[0], two))       # (na, S)
    out_bias = jnp.pad(bias_as.reshape(1, n_lat), ((0, 0), (0, n_pad - n_lat)))

    obsact_dim = obsact.shape[-1]
    state_dim = state.shape[-1]

    # Batch tiling: big tiles (per-step working set << 1 MiB even on v7x's
    # 64 MiB VMEM); for non-trivial bs use >= 2 grid steps so the "parallel"
    # axis can shard across the two TensorCores on v7x.
    if bs <= 8:
        block_bs = bs
    else:
        block_bs = min(1024, _round_up(pl.cdiv(bs, 2), 8), _round_up(bs, 8))
    grid = (pl.cdiv(bs, block_bs),)

    def _bcast(arr):                       # broadcast (weight) block spec
        nd = arr.ndim
        return pl.BlockSpec(arr.shape, lambda i, _nd=nd: (0,) * _nd)

    in_specs = [
        pl.BlockSpec((block_bs, na, obsact_dim), lambda i: (i, 0, 0)),   # obs || actions
        pl.BlockSpec((block_bs, state_dim), lambda i: (i, 0)),           # state
        _bcast(w_obsact), _bcast(w_state),
        _bcast(w_hs), _bcast(w_ho), _bcast(out_bias),
    ]
    out_spec = pl.BlockSpec((block_bs, n_pad), lambda i: (i, 0))

    slab = pl.pallas_call(
        _encoder_kernel,
        out_shape=jax.ShapeDtypeStruct((bs, n_pad), jnp.float32),
        grid=grid,
        in_specs=in_specs,
        out_specs=out_spec,
        compiler_params=pltpu.CompilerParams(dimension_semantics=("parallel",)),
    )(obsact, state, w_obsact, w_state, w_hs, w_ho, out_bias)

    encoded = slab[:, :n_lat].reshape(bs, na, S)
    return encoded, bs


# ---------------------------------------------------------------------------
# Pure-JAX reference (mirrors the torch forward) for verification
# ---------------------------------------------------------------------------
def reference_forward(cfg, params, obs, state, actions, task_repre):
    na, E, S = cfg.n_agents, cfg.entity_embed_dim, cfg.state_latent_dim
    bs = obs.shape[0]
    obs2 = obs.reshape(bs * na, -1)
    act2 = actions.reshape(bs * na, -1)
    own, enemy_l, ally_l = decompose_obs(cfg, obs2)
    own_cat = jnp.concatenate([own, act2], -1)

    wo, bo = params["own"]
    wa, ba = params["ally"]
    we, be = params["enemy"]
    wsa, bsa = params["s_ally"]
    wse, bse = params["s_enemy"]
    wh, bh = params["hyper"]

    own_h = own_cat @ wo + bo
    ally_h = jnp.stack([a @ wa + ba for a in ally_l], 0)
    enemy_h = jnp.stack([e @ we + be for e in enemy_l], 0)
    obs_hidden = jnp.concatenate([own_h[None], ally_h, enemy_h], 0).mean(0)
    obs_hidden = obs_hidden.reshape(bs, na, E)

    state1 = state[:, None, :]
    a_states, e_states = decompose_state(cfg, state1)
    sal = jnp.squeeze(jnp.stack(a_states, 0), -2)
    sen = jnp.squeeze(jnp.stack(e_states, 0), -2)
    sa_h = sal @ wsa + bsa
    se_h = sen @ wse + bse
    state_hidden = jnp.concatenate([sa_h, se_h], 0).mean(0)

    tot = jnp.concatenate(
        [jnp.broadcast_to(state_hidden[:, None, :], (bs, na, E)), obs_hidden], -1)
    tw = (task_repre @ wh + bh).reshape(na, 2 * E, S)
    enc = jnp.einsum("ban,ans->bas", tot, tw)
    return enc, bs


if __name__ == "__main__":
    cfg = Config()
    key = jax.random.PRNGKey(0)
    kp, kd = jax.random.split(key)
    params = init_params(cfg, kp)

    fwd = jax.jit(lambda o, s, a, t: pooling_mpe_encoder(cfg, params, o, s, a, t))

    # bs=4 : single-block path; bs=20 : multi-step grid with a trailing partial block.
    for bs in (4, 20):
        ko, ks, ka, kt = jax.random.split(jax.random.fold_in(kd, bs), 4)
        obs = jax.random.normal(ko, (bs, cfg.n_agents, cfg.obs_dim), jnp.float32)
        state = jax.random.normal(ks, (bs, cfg.state_dim), jnp.float32)
        actions = jax.random.normal(ka, (bs, cfg.n_agents, cfg.n_actions), jnp.float32)
        task_repre = jax.random.normal(kt, (cfg.n_agents, cfg.task_repre_dim), jnp.float32)

        encoded, out_bs = fwd(obs, state, actions, task_repre)
        encoded = jax.block_until_ready(encoded)

        ref, _ = reference_forward(cfg, params, obs, state, actions, task_repre)
        assert encoded.shape == (bs, cfg.n_agents, cfg.state_latent_dim)
        assert int(out_bs) == bs
        max_err = float(jnp.max(jnp.abs(encoded - ref)))
        assert jnp.allclose(encoded, ref, rtol=1e-3, atol=1e-3), max_err

    print("KERNEL_OK")
</pallas_src>

<mosaic_0001>
module attributes {stable_mosaic.version = 11 : i64} {
  func.func @_encoder_kernel(%arg0: i32, %arg1: memref<4x3x27xf32, #tpu.memory_space<vmem>>, %arg2: memref<4x21xf32, #tpu.memory_space<vmem>>, %arg3: memref<27x32xf32, #tpu.memory_space<vmem>>, %arg4: memref<21x32xf32, #tpu.memory_space<vmem>>, %arg5: memref<32x128xf32, #tpu.memory_space<vmem>>, %arg6: memref<3x32x128xf32, #tpu.memory_space<vmem>>, %arg7: memref<1x128xf32, #tpu.memory_space<vmem>>, %arg8: memref<4x128xf32, #tpu.memory_space<vmem>>) attributes {dimension_semantics = [#tpu.dimension_semantics<parallel>], iteration_bounds = array<i64: 1>, scalar_prefetch = 0 : i64, scratch_operands = 0 : i64, tpu.core_type = #tpu.core_type<tc>, window_params = [{transform_indices = @transform_0, window_bounds = array<i64: 4, 3, 27>}, {transform_indices = @transform_1, window_bounds = array<i64: 4, 21>}, {pipeline_mode = #tpu.pipeline_mode<synchronous>, transform_indices = @transform_2, window_bounds = array<i64: 27, 32>}, {pipeline_mode = #tpu.pipeline_mode<synchronous>, transform_indices = @transform_3, window_bounds = array<i64: 21, 32>}, {pipeline_mode = #tpu.pipeline_mode<synchronous>, transform_indices = @transform_4, window_bounds = array<i64: 32, 128>}, {pipeline_mode = #tpu.pipeline_mode<synchronous>, transform_indices = @transform_5, window_bounds = array<i64: 3, 32, 128>}, {pipeline_mode = #tpu.pipeline_mode<synchronous>, transform_indices = @transform_6, window_bounds = array<i64: 1, 128>}, {transform_indices = @transform_7, window_bounds = array<i64: 4, 128>}]} {
    %c0 = arith.constant 0 : index
    %c0_0 = arith.constant 0 : index
    %0 = vector.load %arg2[%c0, %c0_0] : memref<4x21xf32, #tpu.memory_space<vmem>>, vector<4x21xf32>
    %c0_1 = arith.constant 0 : index
    %c0_2 = arith.constant 0 : index
    %1 = vector.load %arg4[%c0_1, %c0_2] : memref<21x32xf32, #tpu.memory_space<vmem>>, vector<21x32xf32>
    %cst = arith.constant dense<0.000000e+00> : vector<4x32xf32>
    %2 = tpu.matmul %0, %1, %cst {dimension_numbers = #tpu.dot_dimension_numbers<[1], [0], [0], [1], [0, 0, 1, 1], [], []>} : vector<4x21xf32>, vector<21x32xf32>, vector<4x32xf32> -> vector<4x32xf32>
    %c0_3 = arith.constant 0 : index
    %c0_4 = arith.constant 0 : index
    %3 = vector.load %arg5[%c0_3, %c0_4] : memref<32x128xf32, #tpu.memory_space<vmem>>, vector<32x128xf32>
    %cst_5 = arith.constant dense<0.000000e+00> : vector<4x128xf32>
    %4 = tpu.matmul %2, %3, %cst_5 {dimension_numbers = #tpu.dot_dimension_numbers<[1], [0], [0], [1], [0, 0, 1, 1], [], []>} : vector<4x32xf32>, vector<32x128xf32>, vector<4x128xf32> -> vector<4x128xf32>
    %c0_6 = arith.constant 0 : index
    %c0_7 = arith.constant 0 : index
    %5 = vector.load %arg7[%c0_6, %c0_7] : memref<1x128xf32, #tpu.memory_space<vmem>>, vector<1x128xf32>
    %6 = vector.broadcast %5 : vector<1x128xf32> to vector<4x128xf32>
    %7 = arith.addf %4, %6 : vector<4x128xf32>
    %c0_8 = arith.constant 0 : index
    %c0_9 = arith.constant 0 : index
    %c0_10 = arith.constant 0 : index
    %8 = vector.load %arg1[%c0_8, %c0_9, %c0_10] : memref<4x3x27xf32, #tpu.memory_space<vmem>>, vector<4x3x27xf32>
    %9 = vector.extract_strided_slice %8 {offsets = [0, 0, 0], sizes = [4, 1, 27], strides = [1, 1, 1]} : vector<4x3x27xf32> to vector<4x1x27xf32>
    %10 = vector.shape_cast %9 : vector<4x1x27xf32> to vector<4x27xf32>
    %c0_11 = arith.constant 0 : index
    %c0_12 = arith.constant 0 : index
    %11 = vector.load %arg3[%c0_11, %c0_12] : memref<27x32xf32, #tpu.memory_space<vmem>>, vector<27x32xf32>
    %cst_13 = arith.constant dense<0.000000e+00> : vector<4x32xf32>
    %12 = tpu.matmul %10, %11, %cst_13 {dimension_numbers = #tpu.dot_dimension_numbers<[1], [0], [0], [1], [0, 0, 1, 1], [], []>} : vector<4x27xf32>, vector<27x32xf32>, vector<4x32xf32> -> vector<4x32xf32>
    %c0_14 = arith.constant 0 : index
    %c0_15 = arith.constant 0 : index
    %c0_16 = arith.constant 0 : index
    %13 = vector.load %arg6[%c0_14, %c0_15, %c0_16] : memref<3x32x128xf32, #tpu.memory_space<vmem>>, vector<1x32x128xf32>
    %14 = vector.shape_cast %13 : vector<1x32x128xf32> to vector<32x128xf32>
    %cst_17 = arith.constant dense<0.000000e+00> : vector<4x128xf32>
    %15 = tpu.matmul %12, %14, %cst_17 {dimension_numbers = #tpu.dot_dimension_numbers<[1], [0], [0], [1], [0, 0, 1, 1], [], []>} : vector<4x32xf32>, vector<32x128xf32>, vector<4x128xf32> -> vector<4x128xf32>
    %16 = arith.addf %7, %15 : vector<4x128xf32>
    %17 = vector.extract_strided_slice %8 {offsets = [0, 1, 0], sizes = [4, 1, 27], strides = [1, 1, 1]} : vector<4x3x27xf32> to vector<4x1x27xf32>
    %18 = vector.shape_cast %17 : vector<4x1x27xf32> to vector<4x27xf32>
    %c0_18 = arith.constant 0 : index
    %c0_19 = arith.constant 0 : index
    %19 = vector.load %arg3[%c0_18, %c0_19] : memref<27x32xf32, #tpu.memory_space<vmem>>, vector<27x32xf32>
    %cst_20 = arith.constant dense<0.000000e+00> : vector<4x32xf32>
    %20 = tpu.matmul %18, %19, %cst_20 {dimension_numbers = #tpu.dot_dimension_numbers<[1], [0], [0], [1], [0, 0, 1, 1], [], []>} : vector<4x27xf32>, vector<27x32xf32>, vector<4x32xf32> -> vector<4x32xf32>
    %c1 = arith.constant 1 : index
    %c0_21 = arith.constant 0 : index
    %c0_22 = arith.constant 0 : index
    %21 = vector.load %arg6[%c1, %c0_21, %c0_22] : memref<3x32x128xf32, #tpu.memory_space<vmem>>, vector<1x32x128xf32>
    %22 = vector.shape_cast %21 : vector<1x32x128xf32> to vector<32x128xf32>
    %cst_23 = arith.constant dense<0.000000e+00> : vector<4x128xf32>
    %23 = tpu.matmul %20, %22, %cst_23 {dimension_numbers = #tpu.dot_dimension_numbers<[1], [0], [0], [1], [0, 0, 1, 1], [], []>} : vector<4x32xf32>, vector<32x128xf32>, vector<4x128xf32> -> vector<4x128xf32>
    %24 = arith.addf %16, %23 : vector<4x128xf32>
    %25 = vector.extract_strided_slice %8 {offsets = [0, 2, 0], sizes = [4, 1, 27], strides = [1, 1, 1]} : vector<4x3x27xf32> to vector<4x1x27xf32>
    %26 = vector.shape_cast %25 : vector<4x1x27xf32> to vector<4x27xf32>
    %c0_24 = arith.constant 0 : index
    %c0_25 = arith.constant 0 : index
    %27 = vector.load %arg3[%c0_24, %c0_25] : memref<27x32xf32, #tpu.memory_space<vmem>>, vector<27x32xf32>
    %cst_26 = arith.constant dense<0.000000e+00> : vector<4x32xf32>
    %28 = tpu.matmul %26, %27, %cst_26 {dimension_numbers = #tpu.dot_dimension_numbers<[1], [0], [0], [1], [0, 0, 1, 1], [], []>} : vector<4x27xf32>, vector<27x32xf32>, vector<4x32xf32> -> vector<4x32xf32>
    %c2 = arith.constant 2 : index
    %c0_27 = arith.constant 0 : index
    %c0_28 = arith.constant 0 : index
    %29 = vector.load %arg6[%c2, %c0_27, %c0_28] : memref<3x32x128xf32, #tpu.memory_space<vmem>>, vector<1x32x128xf32>
    %30 = vector.shape_cast %29 : vector<1x32x128xf32> to vector<32x128xf32>
    %cst_29 = arith.constant dense<0.000000e+00> : vector<4x128xf32>
    %31 = tpu.matmul %28, %30, %cst_29 {dimension_numbers = #tpu.dot_dimension_numbers<[1], [0], [0], [1], [0, 0, 1, 1], [], []>} : vector<4x32xf32>, vector<32x128xf32>, vector<4x128xf32> -> vector<4x128xf32>
    %32 = arith.addf %24, %31 : vector<4x128xf32>
    %c0_30 = arith.constant 0 : index
    %c0_31 = arith.constant 0 : index
    %33 = vector.load %arg8[%c0_30, %c0_31] : memref<4x128xf32, #tpu.memory_space<vmem>>, vector<4x128xf32>
    tpu.vector_store %arg8[%c0_30, %c0_31], %32 {strides = array<i32>} : memref<4x128xf32, #tpu.memory_space<vmem>>, vector<4x128xf32>,
    return
  }
  func.func @transform_0(%arg0: i32) -> (i32, i32, i32) {
    %c0_i32 = arith.constant 0 : i32
    %c0_i32_0 = arith.constant 0 : i32
    %c0_i32_1 = arith.constant 0 : i32
    return %arg0, %c0_i32, %c0_i32_0 : i32, i32, i32
  }
  func.func @transform_1(%arg0: i32) -> (i32, i32) {
    %c0_i32 = arith.constant 0 : i32
    %c0_i32_0 = arith.constant 0 : i32
    return %arg0, %c0_i32 : i32, i32
  }
  func.func @transform_2(%arg0: i32) -> (i32, i32) {
    %c0_i32 = arith.constant 0 : i32
    %c0_i32_0 = arith.constant 0 : i32
    %c0_i32_1 = arith.constant 0 : i32
    return %c0_i32, %c0_i32_0 : i32, i32
  }
  func.func @transform_3(%arg0: i32) -> (i32, i32) {
    %c0_i32 = arith.constant 0 : i32
    %c0_i32_0 = arith.constant 0 : i32
    %c0_i32_1 = arith.constant 0 : i32
    return %c0_i32, %c0_i32_0 : i32, i32
  }
  func.func @transform_4(%arg0: i32) -> (i32, i32) {
    %c0_i32 = arith.constant 0 : i32
    %c0_i32_0 = arith.constant 0 : i32
    %c0_i32_1 = arith.constant 0 : i32
    return %c0_i32, %c0_i32_0 : i32, i32
  }
  func.func @transform_5(%arg0: i32) -> (i32, i32, i32) {
    %c0_i32 = arith.constant 0 : i32
    %c0_i32_0 = arith.constant 0 : i32
    %c0_i32_1 = arith.constant 0 : i32
    %c0_i32_2 = arith.constant 0 : i32
    return %c0_i32, %c0_i32_0, %c0_i32_1 : i32, i32, i32
  }
  func.func @transform_6(%arg0: i32) -> (i32, i32) {
    %c0_i32 = arith.constant 0 : i32
    %c0_i32_0 = arith.constant 0 : i32
    %c0_i32_1 = arith.constant 0 : i32
    return %c0_i32, %c0_i32_0 : i32, i32
  }
  func.func @transform_7(%arg0: i32) -> (i32, i32) {
    %c0_i32 = arith.constant 0 : i32
    %c0_i32_0 = arith.constant 0 : i32
    return %arg0, %c0_i32 : i32, i32
  }
}

</mosaic_0001>

<llo_original>
// kernel: _lambda_.1
$region0: #{_lambda_.1}
  #allocation0 [shape = 'u32[]', space=smem, size = 0x4, offset = 0x4, fixed_abs, tag = 'smem constant byte address 0x4 - core index']
  #allocation1 [shape = 'u32[144,128]{1,0:T(1,128)}', space=vmem, size = 0x12000, scoped, tag = 'internal scratch']
  %s0 = inlined_call_operand.vmem [shape: f32[4,3,27], index: 0, kind: input, shape index: {}]
  %s1 = inlined_call_operand.vmem [shape: f32[4,21], index: 1, kind: input, shape index: {}]
  %s2 = inlined_call_operand.vmem [shape: f32[27,32], index: 2, kind: input, shape index: {}]
  %s3 = inlined_call_operand.vmem [shape: f32[21,32], index: 3, kind: input, shape index: {}]
  %s4 = inlined_call_operand.vmem [shape: f32[32,128], index: 4, kind: input, shape index: {}]
  %s5 = inlined_call_operand.vmem [shape: f32[3,32,128], index: 5, kind: input, shape index: {}]
  %s6 = inlined_call_operand.vmem [shape: f32[1,128], index: 6, kind: input, shape index: {}]
  %s7 = inlined_call_operand.vmem [shape: f32[4,128], index: 7, kind: output, shape index: {}]
  %s8 = sld [smem:[#allocation0]]
  $region38: #{_lambda_.1} parent=0
    _
  %s10 = ssub.s32 1, %s8
  %s11 = scalar_select 0, %s10, %s8
  // Predicated region
  $region2: #{_lambda_.1} parent=0 // pred_check
    _
  $region3: #{_lambda_.1} parent=0 // pred_check_branch
    %13 = sbr.rel (0) target = $region5
  $region4: #{_lambda_.1} parent=0 // pred_region
    _
  $region5: #{_lambda_.1} parent=0 // pred_fallthru
    _
  // Predicated region
  $region6: #{_lambda_.1} parent=0 // pred_check
    _
  $region7: #{_lambda_.1} parent=0 // pred_check_branch
    %15 = sbr.rel (0) target = $region9
  $region8: #{_lambda_.1} parent=0 // pred_region
    _
  $region9: #{_lambda_.1} parent=0 // pred_fallthru
    _
  // Predicated region
  $region10: #{_lambda_.1} parent=0 // pred_check
    _
  $region11: #{_lambda_.1} parent=0 // pred_check_branch
    %17 = sbr.rel (0) target = $region13
  $region12: #{_lambda_.1} parent=0 // pred_region
    _
  $region13: #{_lambda_.1} parent=0 // pred_fallthru
    _
  // Predicated region
  $region14: #{_lambda_.1} parent=0 // pred_check
    _
  $region15: #{_lambda_.1} parent=0 // pred_check_branch
    %19 = sbr.rel (0) target = $region17
  $region16: #{_lambda_.1} parent=0 // pred_region
    _
  $region17: #{_lambda_.1} parent=0 // pred_fallthru
    _
  // Predicated region
  $region18: #{_lambda_.1} parent=0 // pred_check
    _
  $region19: #{_lambda_.1} parent=0 // pred_check_branch
    %21 = sbr.rel (0) target = $region21
  $region20: #{_lambda_.1} parent=0 // pred_region
    _
  $region21: #{_lambda_.1} parent=0 // pred_fallthru
    _
  // Predicated region
  $region22: #{_lambda_.1} parent=0 // pred_check
    _
  $region23: #{_lambda_.1} parent=0 // pred_check_branch
    %23 = sbr.rel (0) target = $region25
  $region24: #{_lambda_.1} parent=0 // pred_region
    _
  $region25: #{_lambda_.1} parent=0 // pred_fallthru
    _
  // Predicated region
  $region26: #{_lambda_.1} parent=0 // pred_check
    _
  $region27: #{_lambda_.1} parent=0 // pred_check_branch
    %25 = sbr.rel (0) target = $region29
  $region28: #{_lambda_.1} parent=0 // pred_region
    _
  $region29: #{_lambda_.1} parent=0 // pred_fallthru
    _
  %v26 = vld [vmem:[%s1] sm:$0xf]
  %v27 = vld [vmem:[%s3] sm:$0xff]
  %v28 = vld [vmem:[%s3 + $0x8] sm:$0xff]
  %v29 = vld [vmem:[%s3 + $0x10] sm:$0x1f]
  %vm30 = vcmask 171008
  %v32 = vsel %vm30, %v26, 0
  %vm34 = vcmask 1044480
  %v36 = vsel %vm34, %v29, 0
  %38 = vmatprep.subr.mxu0 0.0
  %39 = vmatpush1.msra.mxu0 %v27
  %40 = vmatprep.subr.mxu0 0.0
  %41 = vmatpush1.msra.mxu0 %v28
  %42 = vmatprep.subr.mxu0 0.0
  %43 = vmatpush1.msra.mxu0 %v36
  %44 = vmatprep.subr.mxu0 0.0
  %45 = vmatpush1.msra.mxu0 0.0
  %46 = vmatprep.subr.mxu0 0.0
  %47 = vmatpush1.msra.mxu0 0.0
  %48 = vmatprep.subr.mxu0 0.0
  %49 = vmatpush1.msra.mxu0 0.0
  %50 = vmatprep.subr.mxu0 0.0
  %51 = vmatpush1.msra.mxu0 0.0
  %52 = vmatprep.subr.mxu0 0.0
  %53 = vmatpush1.msra.mxu0 0.0
  %54 = vmatprep.subr.mxu0 0.0
  %55 = vmatpush1.msra.mxu0 0.0
  %56 = vmatprep.subr.mxu0 0.0
  %57 = vmatpush1.msra.mxu0 0.0
  %58 = vmatprep.subr.mxu0 0.0
  %59 = vmatpush1.msra.mxu0 0.0
  %60 = vmatprep.subr.mxu0 0.0
  %61 = vmatpush1.msra.mxu0 0.0
  %62 = vmatprep.subr.mxu0 0.0
  %63 = vmatpush1.msra.mxu0 0.0
  %64 = vmatprep.subr.mxu0 0.0
  %65 = vmatpush1.msra.mxu0 0.0
  %66 = vmatprep.subr.mxu0 0.0
  %67 = vmatpush1.msra.mxu0 0.0
  %68 = vmatprep.subr.mxu0 0.0
  %69 = vmatpush1.msra.mxu0 0.0
  %70 = vmatprep.subr.mxu0 0.0
  %71 = vmatpush1.msra.mxu0 0.0
  %72 = vmatprep.subr.mxu0 0.0
  %73 = vmatpush1.msra.mxu0 0.0
  %74 = vmatprep.subr.mxu0 0.0
  %75 = vmatpush1.msra.mxu0 0.0
  %76 = vmatprep.subr.mxu0 0.0
  %77 = vmatpush1.msra.mxu0 0.0
  %78 = vmatprep.subr.mxu0 0.0
  %79 = vmatpush1.msra.mxu0 0.0
  %80 = vmatprep.subr.mxu0 0.0
  %81 = vmatpush1.msra.mxu0 0.0
  %82 = vmatprep.subr.mxu0 0.0
  %83 = vmatpush1.msra.mxu0 0.0
  %84 = vmatprep.subr.mxu0 0.0
  %85 = vmatpush1.msra.mxu0 0.0
  %86 = vmatprep.subr.mxu0 0.0
  %87 = vmatpush1.msra.mxu0 0.0
  %88 = vmatprep.subr.mxu0 0.0
  %89 = vmatpush1.msra.mxu0 0.0
  %90 = vmatprep.subr.mxu0 0.0
  %91 = vmatpush1.msra.mxu0 0.0
  %92 = vmatprep.subr.mxu0 0.0
  %93 = vmatpush1.msra.mxu0 0.0
  %94 = vmatprep.subr.mxu0 0.0
  %95 = vmatpush1.msra.mxu0 0.0
  %96 = vmatprep.subr.mxu0 0.0
  %97 = vmatpush1.msra.mxu0 0.0
  %98 = vmatprep.subr.mxu0 0.0
  %99 = vmatpush1.msra.mxu0 0.0
  %100 = vmatprep.subr.mxu0 0.0
  %101 = vmatpush1.msra.mxu0 0.0
  %102 = vmatprep.mubr.f32.mxu0 0.0
  %103 = vmatmul.mubr.f32.gmra.mrb[0].mxu0 %v32
  %v104 = vpop.f32.mrb[0].mxu0
  %v105 = vadd.f32 0.0, %v104
  %v106 = vpop.f32.mrb[0].mxu0
  %107 = vdwg.mxu0
  %v108 = vld [vmem:[%s4] sm:$0xff]
  %v109 = vld [vmem:[%s4 + $0x8] sm:$0xff]
  %v110 = vld [vmem:[%s4 + $0x10] sm:$0xff]
  %v111 = vld [vmem:[%s4 + $0x18] sm:$0xff]
  %v112 = vld [vmem:[%s6] sm:$0x1]
  %v114 = vlaneseq
  %v115 = vshrl.u32 %v114, 7
  %v116 = vsub.s32 0, %v115
  %v117 = vrot.slane %v112, %v116
  %vm119 = vcmask 261120
  %v121 = vsel %vm119, %v105, 0
  %123 = vmatprep.subr.mxu0 0.0
  %124 = vmatpush1.msra.mxu0 %v108
  %125 = vmatprep.subr.mxu0 0.0
  %126 = vmatpush1.msra.mxu0 %v109
  %127 = vmatprep.subr.mxu0 0.0
  %128 = vmatpush1.msra.mxu0 %v110
  %129 = vmatprep.subr.mxu0 0.0
  %130 = vmatpush1.msra.mxu0 %v111
  %131 = vmatprep.subr.mxu0 0.0
  %132 = vmatpush1.msra.mxu0 0.0
  %133 = vmatprep.subr.mxu0 0.0
  %134 = vmatpush1.msra.mxu0 0.0
  %135 = vmatprep.subr.mxu0 0.0
  %136 = vmatpush1.msra.mxu0 0.0
  %137 = vmatprep.subr.mxu0 0.0
  %138 = vmatpush1.msra.mxu0 0.0
  %139 = vmatprep.subr.mxu0 0.0
  %140 = vmatpush1.msra.mxu0 0.0
  %141 = vmatprep.subr.mxu0 0.0
  %142 = vmatpush1.msra.mxu0 0.0
  %143 = vmatprep.subr.mxu0 0.0
  %144 = vmatpush1.msra.mxu0 0.0
  %145 = vmatprep.subr.mxu0 0.0
  %146 = vmatpush1.msra.mxu0 0.0
  %147 = vmatprep.subr.mxu0 0.0
  %148 = vmatpush1.msra.mxu0 0.0
  %149 = vmatprep.subr.mxu0 0.0
  %150 = vmatpush1.msra.mxu0 0.0
  %151 = vmatprep.subr.mxu0 0.0
  %152 = vmatpush1.msra.mxu0 0.0
  %153 = vmatprep.subr.mxu0 0.0
  %154 = vmatpush1.msra.mxu0 0.0
  %155 = vmatprep.subr.mxu0 0.0
  %156 = vmatpush1.msra.mxu0 0.0
  %157 = vmatprep.subr.mxu0 0.0
  %158 = vmatpush1.msra.mxu0 0.0
  %159 = vmatprep.subr.mxu0 0.0
  %160 = vmatpush1.msra.mxu0 0.0
  %161 = vmatprep.subr.mxu0 0.0
  %162 = vmatpush1.msra.mxu0 0.0
  %163 = vmatprep.subr.mxu0 0.0
  %164 = vmatpush1.msra.mxu0 0.0
  %165 = vmatprep.subr.mxu0 0.0
  %166 = vmatpush1.msra.mxu0 0.0
  %167 = vmatprep.subr.mxu0 0.0
  %168 = vmatpush1.msra.mxu0 0.0
  %169 = vmatprep.subr.mxu0 0.0
  %170 = vmatpush1.msra.mxu0 0.0
  %171 = vmatprep.subr.mxu0 0.0
  %172 = vmatpush1.msra.mxu0 0.0
  %173 = vmatprep.subr.mxu0 0.0
  %174 = vmatpush1.msra.mxu0 0.0
  %175 = vmatprep.subr.mxu0 0.0
  %176 = vmatpush1.msra.mxu0 0.0
  %177 = vmatprep.subr.mxu0 0.0
  %178 = vmatpush1.msra.mxu0 0.0
  %179 = vmatprep.subr.mxu0 0.0
  %180 = vmatpush1.msra.mxu0 0.0
  %181 = vmatprep.subr.mxu0 0.0
  %182 = vmatpush1.msra.mxu0 0.0
  %183 = vmatprep.subr.mxu0 0.0
  %184 = vmatpush1.msra.mxu0 0.0
  %185 = vmatprep.subr.mxu0 0.0
  %186 = vmatpush1.msra.mxu0 0.0
  %187 = vmatprep.mubr.f32.mxu0 0.0
  %188 = vmatmul.mubr.f32.gmra.mrb[0].mxu0 %v121
  %v189 = vpop.f32.mrb[0].mxu0
  %v190 = vadd.f32 %v117, %v189
  %v191 = vpop.f32.mrb[0].mxu0
  %192 = vdwg.mxu0
  %v193 = vld [vmem:[%s0] sm:$0x7]
  %v194 = vld [vmem:[%s0 + $0x4] sm:$0x7]
  %v195 = vld [vmem:[%s0 + $0x8] sm:$0x7]
  %v196 = vld [vmem:[%s0 + $0xc] sm:$0x7]
  %v197 = vld [vmem:[%s2] sm:$0xff]
  %v198 = vld [vmem:[%s2 + $0x8] sm:$0xff]
  %v199 = vld [vmem:[%s2 + $0x10] sm:$0xff]
  %v200 = vld [vmem:[%s2 + $0x18] sm:$0x7]
  %v205 = vrot.slane %v194, 7
  %vm206 = vcmask 1041409
  %v207 = vsel %vm206, %v205, %v193
  %v208 = vrot.slane %v195, 6
  %vm209 = vcmask 1042434
  %v210 = vsel %vm209, %v208, %v207
  %v211 = vrot.slane %v196, 5
  %vm212 = vcmask 1043459
  %v213 = vsel %vm212, %v211, %v210
  %vm214 = vcmask 220160
  %v215 = vsel %vm214, %v213, 0
  %vm217 = vcmask 1042432
  %v219 = vsel %vm217, %v200, 0
  %221 = vmatprep.subr.mxu0 0.0
  %222 = vmatpush1.msra.mxu0 %v197
  %223 = vmatprep.subr.mxu0 0.0
  %224 = vmatpush1.msra.mxu0 %v198
  %225 = vmatprep.subr.mxu0 0.0
  %226 = vmatpush1.msra.mxu0 %v199
  %227 = vmatprep.subr.mxu0 0.0
  %228 = vmatpush1.msra.mxu0 %v219
  %229 = vmatprep.subr.mxu0 0.0
  %230 = vmatpush1.msra.mxu0 0.0
  %231 = vmatprep.subr.mxu0 0.0
  %232 = vmatpush1.msra.mxu0 0.0
  %233 = vmatprep.subr.mxu0 0.0
  %234 = vmatpush1.msra.mxu0 0.0
  %235 = vmatprep.subr.mxu0 0.0
  %236 = vmatpush1.msra.mxu0 0.0
  %237 = vmatprep.subr.mxu0 0.0
  %238 = vmatpush1.msra.mxu0 0.0
  %239 = vmatprep.subr.mxu0 0.0
  %240 = vmatpush1.msra.mxu0 0.0
  %241 = vmatprep.subr.mxu0 0.0
  %242 = vmatpush1.msra.mxu0 0.0
  %243 = vmatprep.subr.mxu0 0.0
  %244 = vmatpush1.msra.mxu0 0.0
  %245 = vmatprep.subr.mxu0 0.0
  %246 = vmatpush1.msra.mxu0 0.0
  %247 = vmatprep.subr.mxu0 0.0
  %248 = vmatpush1.msra.mxu0 0.0
  %249 = vmatprep.subr.mxu0 0.0
  %250 = vmatpush1.msra.mxu0 0.0
  %251 = vmatprep.subr.mxu0 0.0
  %252 = vmatpush1.msra.mxu0 0.0
  %253 = vmatprep.subr.mxu0 0.0
  %254 = vmatpush1.msra.mxu0 0.0
  %255 = vmatprep.subr.mxu0 0.0
  %256 = vmatpush1.msra.mxu0 0.0
  %257 = vmatprep.subr.mxu0 0.0
  %258 = vmatpush1.msra.mxu0 0.0
  %259 = vmatprep.subr.mxu0 0.0
  %260 = vmatpush1.msra.mxu0 0.0
  %261 = vmatprep.subr.mxu0 0.0
  %262 = vmatpush1.msra.mxu0 0.0
  %263 = vmatprep.subr.mxu0 0.0
  %264 = vmatpush1.msra.mxu0 0.0
  %265 = vmatprep.subr.mxu0 0.0
  %266 = vmatpush1.msra.mxu0 0.0
  %267 = vmatprep.subr.mxu0 0.0
  %268 = vmatpush1.msra.mxu0 0.0
  %269 = vmatprep.subr.mxu0 0.0
  %270 = vmatpush1.msra.mxu0 0.0
  %271 = vmatprep.subr.mxu0 0.0
  %272 = vmatpush1.msra.mxu0 0.0
  %273 = vmatprep.subr.mxu0 0.0
  %274 = vmatpush1.msra.mxu0 0.0
  %275 = vmatprep.subr.mxu0 0.0
  %276 = vmatpush1.msra.mxu0 0.0
  %277 = vmatprep.subr.mxu0 0.0
  %278 = vmatpush1.msra.mxu0 0.0
  %279 = vmatprep.subr.mxu0 0.0
  %280 = vmatpush1.msra.mxu0 0.0
  %281 = vmatprep.subr.mxu0 0.0
  %282 = vmatpush1.msra.mxu0 0.0
  %283 = vmatprep.subr.mxu0 0.0
  %284 = vmatpush1.msra.mxu0 0.0
  %285 = vmatprep.mubr.f32.mxu0 0.0
  %286 = vmatmul.mubr.f32.gmra.mrb[0].mxu0 %v215
  %v287 = vpop.f32.mrb[0].mxu0
  %v288 = vadd.f32 0.0, %v287
  %v289 = vpop.f32.mrb[0].mxu0
  %290 = vdwg.mxu0
  %v291 = vld [vmem:[%s5] sm:$0xff]
  %v292 = vld [vmem:[%s5 + $0x8] sm:$0xff]
  %v293 = vld [vmem:[%s5 + $0x10] sm:$0xff]
  %v294 = vld [vmem:[%s5 + $0x18] sm:$0xff]
  %v296 = vsel %vm119, %v288, 0
  %298 = vmatprep.subr.mxu0 0.0
  %299 = vmatpush1.msra.mxu0 %v291
  %300 = vmatprep.subr.mxu0 0.0
  %301 = vmatpush1.msra.mxu0 %v292
  %302 = vmatprep.subr.mxu0 0.0
  %303 = vmatpush1.msra.mxu0 %v293
  %304 = vmatprep.subr.mxu0 0.0
  %305 = vmatpush1.msra.mxu0 %v294
  %306 = vmatprep.subr.mxu0 0.0
  %307 = vmatpush1.msra.mxu0 0.0
  %308 = vmatprep.subr.mxu0 0.0
  %309 = vmatpush1.msra.mxu0 0.0
  %310 = vmatprep.subr.mxu0 0.0
  %311 = vmatpush1.msra.mxu0 0.0
  %312 = vmatprep.subr.mxu0 0.0
  %313 = vmatpush1.msra.mxu0 0.0
  %314 = vmatprep.subr.mxu0 0.0
  %315 = vmatpush1.msra.mxu0 0.0
  %316 = vmatprep.subr.mxu0 0.0
  %317 = vmatpush1.msra.mxu0 0.0
  %318 = vmatprep.subr.mxu0 0.0
  %319 = vmatpush1.msra.mxu0 0.0
  %320 = vmatprep.subr.mxu0 0.0
  %321 = vmatpush1.msra.mxu0 0.0
  %322 = vmatprep.subr.mxu0 0.0
  %323 = vmatpush1.msra.mxu0 0.0
  %324 = vmatprep.subr.mxu0 0.0
  %325 = vmatpush1.msra.mxu0 0.0
  %326 = vmatprep.subr.mxu0 0.0
  %327 = vmatpush1.msra.mxu0 0.0
  %328 = vmatprep.subr.mxu0 0.0
  %329 = vmatpush1.msra.mxu0 0.0
  %330 = vmatprep.subr.mxu0 0.0
  %331 = vmatpush1.msra.mxu0 0.0
  %332 = vmatprep.subr.mxu0 0.0
  %333 = vmatpush1.msra.mxu0 0.0
  %334 = vmatprep.subr.mxu0 0.0
  %335 = vmatpush1.msra.mxu0 0.0
  %336 = vmatprep.subr.mxu0 0.0
  %337 = vmatpush1.msra.mxu0 0.0
  %338 = vmatprep.subr.mxu0 0.0
  %339 = vmatpush1.msra.mxu0 0.0
  %340 = vmatprep.subr.mxu0 0.0
  %341 = vmatpush1.msra.mxu0 0.0
  %342 = vmatprep.subr.mxu0 0.0
  %343 = vmatpush1.msra.mxu0 0.0
  %344 = vmatprep.subr.mxu0 0.0
  %345 = vmatpush1.msra.mxu0 0.0
  %346 = vmatprep.subr.mxu0 0.0
  %347 = vmatpush1.msra.mxu0 0.0
  %348 = vmatprep.subr.mxu0 0.0
  %349 = vmatpush1.msra.mxu0 0.0
  %350 = vmatprep.subr.mxu0 0.0
  %351 = vmatpush1.msra.mxu0 0.0
  %352 = vmatprep.subr.mxu0 0.0
  %353 = vmatpush1.msra.mxu0 0.0
  %354 = vmatprep.subr.mxu0 0.0
  %355 = vmatpush1.msra.mxu0 0.0
  %356 = vmatprep.subr.mxu0 0.0
  %357 = vmatpush1.msra.mxu0 0.0
  %358 = vmatprep.subr.mxu0 0.0
  %359 = vmatpush1.msra.mxu0 0.0
  %360 = vmatprep.subr.mxu0 0.0
  %361 = vmatpush1.msra.mxu0 0.0
  %362 = vmatprep.mubr.f32.mxu0 0.0
  %363 = vmatmul.mubr.f32.gmra.mrb[0].mxu0 %v296
  %v364 = vpop.f32.mrb[0].mxu0
  %v365 = vadd.f32 0.0, %v364
  %v366 = vpop.f32.mrb[0].mxu0
  %367 = vdwg.mxu0
  %v368 = vadd.f32 %v190, %v365
  %v369 = vrot.slane %v193, 1
  %v370 = vsel %vm206, %v194, %v369
  %v371 = vrot.slane %v195, 7
  %v372 = vsel %vm209, %v371, %v370
  %v373 = vrot.slane %v196, 6
  %v374 = vsel %vm212, %v373, %v372
  %v375 = vsel %vm214, %v374, 0
  %377 = vmatprep.subr.mxu0 0.0
  %378 = vmatpush1.msra.mxu0 %v197
  %379 = vmatprep.subr.mxu0 0.0
  %380 = vmatpush1.msra.mxu0 %v198
  %381 = vmatprep.subr.mxu0 0.0
  %382 = vmatpush1.msra.mxu0 %v199
  %383 = vmatprep.subr.mxu0 0.0
  %384 = vmatpush1.msra.mxu0 %v219
  %385 = vmatprep.subr.mxu0 0.0
  %386 = vmatpush1.msra.mxu0 0.0
  %387 = vmatprep.subr.mxu0 0.0
  %388 = vmatpush1.msra.mxu0 0.0
  %389 = vmatprep.subr.mxu0 0.0
  %390 = vmatpush1.msra.mxu0 0.0
  %391 = vmatprep.subr.mxu0 0.0
  %392 = vmatpush1.msra.mxu0 0.0
  %393 = vmatprep.subr.mxu0 0.0
  %394 = vmatpush1.msra.mxu0 0.0
  %395 = vmatprep.subr.mxu0 0.0
  %396 = vmatpush1.msra.mxu0 0.0
  %397 = vmatprep.subr.mxu0 0.0
  %398 = vmatpush1.msra.mxu0 0.0
  %399 = vmatprep.subr.mxu0 0.0
  %400 = vmatpush1.msra.mxu0 0.0
  %401 = vmatprep.subr.mxu0 0.0
  %402 = vmatpush1.msra.mxu0 0.0
  %403 = vmatprep.subr.mxu0 0.0
  %404 = vmatpush1.msra.mxu0 0.0
  %405 = vmatprep.subr.mxu0 0.0
  %406 = vmatpush1.msra.mxu0 0.0
  %407 = vmatprep.subr.mxu0 0.0
  %408 = vmatpush1.msra.mxu0 0.0
  %409 = vmatprep.subr.mxu0 0.0
  %410 = vmatpush1.msra.mxu0 0.0
  %411 = vmatprep.subr.mxu0 0.0
  %412 = vmatpush1.msra.mxu0 0.0
  %413 = vmatprep.subr.mxu0 0.0
  %414 = vmatpush1.msra.mxu0 0.0
  %415 = vmatprep.subr.mxu0 0.0
  %416 = vmatpush1.msra.mxu0 0.0
  %417 = vmatprep.subr.mxu0 0.0
  %418 = vmatpush1.msra.mxu0 0.0
  %419 = vmatprep.subr.mxu0 0.0
  %420 = vmatpush1.msra.mxu0 0.0
  %421 = vmatprep.subr.mxu0 0.0
  %422 = vmatpush1.msra.mxu0 0.0
  %423 = vmatprep.subr.mxu0 0.0
  %424 = vmatpush1.msra.mxu0 0.0
  %425 = vmatprep.subr.mxu0 0.0
  %426 = vmatpush1.msra.mxu0 0.0
  %427 = vmatprep.subr.mxu0 0.0
  %428 = vmatpush1.msra.mxu0 0.0
  %429 = vmatprep.subr.mxu0 0.0
  %430 = vmatpush1.msra.mxu0 0.0
  %431 = vmatprep.subr.mxu0 0.0
  %432 = vmatpush1.msra.mxu0 0.0
  %433 = vmatprep.subr.mxu0 0.0
  %434 = vmatpush1.msra.mxu0 0.0
  %435 = vmatprep.subr.mxu0 0.0
  %436 = vmatpush1.msra.mxu0 0.0
  %437 = vmatprep.subr.mxu0 0.0
  %438 = vmatpush1.msra.mxu0 0.0
  %439 = vmatprep.subr.mxu0 0.0
  %440 = vmatpush1.msra.mxu0 0.0
  %441 = vmatprep.mubr.f32.mxu0 0.0
  %442 = vmatmul.mubr.f32.gmra.mrb[0].mxu0 %v375
  %v443 = vpop.f32.mrb[0].mxu0
  %v444 = vadd.f32 0.0, %v443
  %v445 = vpop.f32.mrb[0].mxu0
  %446 = vdwg.mxu0
  %s447 = scalar_lea.vmem %s5, 32
  %v448 = vld [vmem:[%s447] sm:$0xff]
  %v449 = vld [vmem:[%s447 + $0x8] sm:$0xff]
  %v450 = vld [vmem:[%s447 + $0x10] sm:$0xff]
  %v451 = vld [vmem:[%s447 + $0x18] sm:$0xff]
  %v453 = vsel %vm119, %v444, 0
  %455 = vmatprep.subr.mxu0 0.0
  %456 = vmatpush1.msra.mxu0 %v448
  %457 = vmatprep.subr.mxu0 0.0
  %458 = vmatpush1.msra.mxu0 %v449
  %459 = vmatprep.subr.mxu0 0.0
  %460 = vmatpush1.msra.mxu0 %v450
  %461 = vmatprep.subr.mxu0 0.0
  %462 = vmatpush1.msra.mxu0 %v451
  %463 = vmatprep.subr.mxu0 0.0
  %464 = vmatpush1.msra.mxu0 0.0
  %465 = vmatprep.subr.mxu0 0.0
  %466 = vmatpush1.msra.mxu0 0.0
  %467 = vmatprep.subr.mxu0 0.0
  %468 = vmatpush1.msra.mxu0 0.0
  %469 = vmatprep.subr.mxu0 0.0
  %470 = vmatpush1.msra.mxu0 0.0
  %471 = vmatprep.subr.mxu0 0.0
  %472 = vmatpush1.msra.mxu0 0.0
  %473 = vmatprep.subr.mxu0 0.0
  %474 = vmatpush1.msra.mxu0 0.0
  %475 = vmatprep.subr.mxu0 0.0
  %476 = vmatpush1.msra.mxu0 0.0
  %477 = vmatprep.subr.mxu0 0.0
  %478 = vmatpush1.msra.mxu0 0.0
  %479 = vmatprep.subr.mxu0 0.0
  %480 = vmatpush1.msra.mxu0 0.0
  %481 = vmatprep.subr.mxu0 0.0
  %482 = vmatpush1.msra.mxu0 0.0
  %483 = vmatprep.subr.mxu0 0.0
  %484 = vmatpush1.msra.mxu0 0.0
  %485 = vmatprep.subr.mxu0 0.0
  %486 = vmatpush1.msra.mxu0 0.0
  %487 = vmatprep.subr.mxu0 0.0
  %488 = vmatpush1.msra.mxu0 0.0
  %489 = vmatprep.subr.mxu0 0.0
  %490 = vmatpush1.msra.mxu0 0.0
  %491 = vmatprep.subr.mxu0 0.0
  %492 = vmatpush1.msra.mxu0 0.0
  %493 = vmatprep.subr.mxu0 0.0
  %494 = vmatpush1.msra.mxu0 0.0
  %495 = vmatprep.subr.mxu0 0.0
  %496 = vmatpush1.msra.mxu0 0.0
  %497 = vmatprep.subr.mxu0 0.0
  %498 = vmatpush1.msra.mxu0 0.0
  %499 = vmatprep.subr.mxu0 0.0
  %500 = vmatpush1.msra.mxu0 0.0
  %501 = vmatprep.subr.mxu0 0.0
  %502 = vmatpush1.msra.mxu0 0.0
  %503 = vmatprep.subr.mxu0 0.0
  %504 = vmatpush1.msra.mxu0 0.0
  %505 = vmatprep.subr.mxu0 0.0
  %506 = vmatpush1.msra.mxu0 0.0
  %507 = vmatprep.subr.mxu0 0.0
  %508 = vmatpush1.msra.mxu0 0.0
  %509 = vmatprep.subr.mxu0 0.0
  %510 = vmatpush1.msra.mxu0 0.0
  %511 = vmatprep.subr.mxu0 0.0
  %512 = vmatpush1.msra.mxu0 0.0
  %513 = vmatprep.subr.mxu0 0.0
  %514 = vmatpush1.msra.mxu0 0.0
  %515 = vmatprep.subr.mxu0 0.0
  %516 = vmatpush1.msra.mxu0 0.0
  %517 = vmatprep.subr.mxu0 0.0
  %518 = vmatpush1.msra.mxu0 0.0
  %519 = vmatprep.mubr.f32.mxu0 0.0
  %520 = vmatmul.mubr.f32.gmra.mrb[0].mxu0 %v453
  %v521 = vpop.f32.mrb[0].mxu0
  %v522 = vadd.f32 0.0, %v521
  %v523 = vpop.f32.mrb[0].mxu0
  %524 = vdwg.mxu0
  %v525 = vadd.f32 %v368, %v522
  %v526 = vrot.slane %v193, 2
  %v527 = vrot.slane %v194, 1
  %v528 = vsel %vm206, %v527, %v526
  %v529 = vsel %vm209, %v195, %v528
  %v530 = vrot.slane %v196, 7
  %v531 = vsel %vm212, %v530, %v529
  %v532 = vsel %vm214, %v531, 0
  %534 = vmatprep.subr.mxu0 0.0
  %535 = vmatpush1.msra.mxu0 %v197
  %536 = vmatprep.subr.mxu0 0.0
  %537 = vmatpush1.msra.mxu0 %v198
  %538 = vmatprep.subr.mxu0 0.0
  %539 = vmatpush1.msra.mxu0 %v199
  %540 = vmatprep.subr.mxu0 0.0
  %541 = vmatpush1.msra.mxu0 %v219
  %542 = vmatprep.subr.mxu0 0.0
  %543 = vmatpush1.msra.mxu0 0.0
  %544 = vmatprep.subr.mxu0 0.0
  %545 = vmatpush1.msra.mxu0 0.0
  %546 = vmatprep.subr.mxu0 0.0
  %547 = vmatpush1.msra.mxu0 0.0
  %548 = vmatprep.subr.mxu0 0.0
  %549 = vmatpush1.msra.mxu0 0.0
  %550 = vmatprep.subr.mxu0 0.0
  %551 = vmatpush1.msra.mxu0 0.0
  %552 = vmatprep.subr.mxu0 0.0
  %553 = vmatpush1.msra.mxu0 0.0
  %554 = vmatprep.subr.mxu0 0.0
  %555 = vmatpush1.msra.mxu0 0.0
  %556 = vmatprep.subr.mxu0 0.0
  %557 = vmatpush1.msra.mxu0 0.0
  %558 = vmatprep.subr.mxu0 0.0
  %559 = vmatpush1.msra.mxu0 0.0
  %560 = vmatprep.subr.mxu0 0.0
  %561 = vmatpush1.msra.mxu0 0.0
  %562 = vmatprep.subr.mxu0 0.0
  %563 = vmatpush1.msra.mxu0 0.0
  %564 = vmatprep.subr.mxu0 0.0
  %565 = vmatpush1.msra.mxu0 0.0
  %566 = vmatprep.subr.mxu0 0.0
  %567 = vmatpush1.msra.mxu0 0.0
  %568 = vmatprep.subr.mxu0 0.0
  %569 = vmatpush1.msra.mxu0 0.0
  %570 = vmatprep.subr.mxu0 0.0
  %571 = vmatpush1.msra.mxu0 0.0
  %572 = vmatprep.subr.mxu0 0.0
  %573 = vmatpush1.msra.mxu0 0.0
  %574 = vmatprep.subr.mxu0 0.0
  %575 = vmatpush1.msra.mxu0 0.0
  %576 = vmatprep.subr.mxu0 0.0
  %577 = vmatpush1.msra.mxu0 0.0
  %578 = vmatprep.subr.mxu0 0.0
  %579 = vmatpush1.msra.mxu0 0.0
  %580 = vmatprep.subr.mxu0 0.0
  %581 = vmatpush1.msra.mxu0 0.0
  %582 = vmatprep.subr.mxu0 0.0
  %583 = vmatpush1.msra.mxu0 0.0
  %584 = vmatprep.subr.mxu0 0.0
  %585 = vmatpush1.msra.mxu0 0.0
  %586 = vmatprep.subr.mxu0 0.0
  %587 = vmatpush1.msra.mxu0 0.0
  %588 = vmatprep.subr.mxu0 0.0
  %589 = vmatpush1.msra.mxu0 0.0
  %590 = vmatprep.subr.mxu0 0.0
  %591 = vmatpush1.msra.mxu0 0.0
  %592 = vmatprep.subr.mxu0 0.0
  %593 = vmatpush1.msra.mxu0 0.0
  %594 = vmatprep.subr.mxu0 0.0
  %595 = vmatpush1.msra.mxu0 0.0
  %596 = vmatprep.subr.mxu0 0.0
  %597 = vmatpush1.msra.mxu0 0.0
  %598 = vmatprep.mubr.f32.mxu0 0.0
  %599 = vmatmul.mubr.f32.gmra.mrb[0].mxu0 %v532
  %v600 = vpop.f32.mrb[0].mxu0
  %v601 = vadd.f32 0.0, %v600
  %v602 = vpop.f32.mrb[0].mxu0
  %603 = vdwg.mxu0
  %s604 = scalar_lea.vmem %s5, 64
  %v605 = vld [vmem:[%s604] sm:$0xff]
  %v606 = vld [vmem:[%s604 + $0x8] sm:$0xff]
  %v607 = vld [vmem:[%s604 + $0x10] sm:$0xff]
  %v608 = vld [vmem:[%s604 + $0x18] sm:$0xff]
  %v610 = vsel %vm119, %v601, 0
  %612 = vmatprep.subr.mxu0 0.0
  %613 = vmatpush1.msra.mxu0 %v605
  %614 = vmatprep.subr.mxu0 0.0
  %615 = vmatpush1.msra.mxu0 %v606
  %616 = vmatprep.subr.mxu0 0.0
  %617 = vmatpush1.msra.mxu0 %v607
  %618 = vmatprep.subr.mxu0 0.0
  %619 = vmatpush1.msra.mxu0 %v608
  %620 = vmatprep.subr.mxu0 0.0
  %621 = vmatpush1.msra.mxu0 0.0
  %622 = vmatprep.subr.mxu0 0.0
  %623 = vmatpush1.msra.mxu0 0.0
  %624 = vmatprep.subr.mxu0 0.0
  %625 = vmatpush1.msra.mxu0 0.0
  %626 = vmatprep.subr.mxu0 0.0
  %627 = vmatpush1.msra.mxu0 0.0
  %628 = vmatprep.subr.mxu0 0.0
  %629 = vmatpush1.msra.mxu0 0.0
  %630 = vmatprep.subr.mxu0 0.0
  %631 = vmatpush1.msra.mxu0 0.0
  %632 = vmatprep.subr.mxu0 0.0
  %633 = vmatpush1.msra.mxu0 0.0
  %634 = vmatprep.subr.mxu0 0.0
  %635 = vmatpush1.msra.mxu0 0.0
  %636 = vmatprep.subr.mxu0 0.0
  %637 = vmatpush1.msra.mxu0 0.0
  %638 = vmatprep.subr.mxu0 0.0
  %639 = vmatpush1.msra.mxu0 0.0
  %640 = vmatprep.subr.mxu0 0.0
  %641 = vmatpush1.msra.mxu0 0.0
  %642 = vmatprep.subr.mxu0 0.0
  %643 = vmatpush1.msra.mxu0 0.0
  %644 = vmatprep.subr.mxu0 0.0
  %645 = vmatpush1.msra.mxu0 0.0
  %646 = vmatprep.subr.mxu0 0.0
  %647 = vmatpush1.msra.mxu0 0.0
  %648 = vmatprep.subr.mxu0 0.0
  %649 = vmatpush1.msra.mxu0 0.0
  %650 = vmatprep.subr.mxu0 0.0
  %651 = vmatpush1.msra.mxu0 0.0
  %652 = vmatprep.subr.mxu0 0.0
  %653 = vmatpush1.msra.mxu0 0.0
  %654 = vmatprep.subr.mxu0 0.0
  %655 = vmatpush1.msra.mxu0 0.0
  %656 = vmatprep.subr.mxu0 0.0
  %657 = vmatpush1.msra.mxu0 0.0
  %658 = vmatprep.subr.mxu0 0.0
  %659 = vmatpush1.msra.mxu0 0.0
  %660 = vmatprep.subr.mxu0 0.0
  %661 = vmatpush1.msra.mxu0 0.0
  %662 = vmatprep.subr.mxu0 0.0
  %663 = vmatpush1.msra.mxu0 0.0
  %664 = vmatprep.subr.mxu0 0.0
  %665 = vmatpush1.msra.mxu0 0.0
  %666 = vmatprep.subr.mxu0 0.0
  %667 = vmatpush1.msra.mxu0 0.0
  %668 = vmatprep.subr.mxu0 0.0
  %669 = vmatpush1.msra.mxu0 0.0
  %670 = vmatprep.subr.mxu0 0.0
  %671 = vmatpush1.msra.mxu0 0.0
  %672 = vmatprep.subr.mxu0 0.0
  %673 = vmatpush1.msra.mxu0 0.0
  %674 = vmatprep.subr.mxu0 0.0
  %675 = vmatpush1.msra.mxu0 0.0
  %676 = vmatprep.mubr.f32.mxu0 0.0
  %677 = vmatmul.mubr.f32.gmra.mrb[0].mxu0 %v610
  %v678 = vpop.f32.mrb[0].mxu0
  %v679 = vadd.f32 0.0, %v678
  %v680 = vpop.f32.mrb[0].mxu0
  %681 = vdwg.mxu0
  %v682 = vadd.f32 %v525, %v679
  %683 = vst [vmem:[%s7] sm:$0xf] %v682
  // Predicated region
  $region30: #{_lambda_.1} parent=0 // pred_check
    _
  $region31: #{_lambda_.1} parent=0 // pred_check_branch
    %685 = sbr.rel (0) target = $region33
  $region32: #{_lambda_.1} parent=0 // pred_region
    _
  $region33: #{_lambda_.1} parent=0 // pred_fallthru
    _
  // Predicated region
  $region34: #{_lambda_.1} parent=0 // pred_check
    _
  $region35: #{_lambda_.1} parent=0 // pred_check_branch
    %687 = sbr.rel (0) target = $region37
  $region36: #{_lambda_.1} parent=0 // pred_region
    _
  $region37: #{_lambda_.1} parent=0 // pred_fallthru
    _

</llo_original>
